<compile_context>
chip_gen: v6e
topology: v6e:2x2x1
jax: 0.10.0
libtpu: 0.0.40
codegen_flags: <defaults>
</compile_context>

<pallas_src>
import jax
import jax.numpy as jnp
from jax import lax
from jax.experimental import pallas as pl
from jax.experimental.pallas import tpu as pltpu


def _round_up(x, m):
    return (x + m - 1) // m * m


def _sigmoid(v):
    # Explicit exp-based sigmoid: lowers to exp + add + div on TPU.
    return 1.0 / (1.0 + jnp.exp(-v))


def _choose_tiles(B, A, Rp, GG, in_itemsize, out_itemsize=4,
                  max_tb=8, max_tl=2048, io_budget=8 << 20):
    """Pick (TB, TL, GGp, Bp): batch tile, lane tile, padded lane/batch extents."""
    GGp = _round_up(GG, 128)
    # Lane tile: largest multiple of 128 that divides GGp and is <= max_tl.
    n = GGp // 128
    d_best = 1
    for d in range(1, n + 1):
        if n % d == 0 and d * 128 <= max_tl:
            d_best = d
    TL = d_best * 128
    lane_steps = GGp // TL
    # Double-buffered input + f32 output block bytes per batch element.
    per_b = 2 * A * Rp * TL * (in_itemsize + out_itemsize)
    TB = max(1, min(max_tb, B, io_budget // per_b))
    # Keep >= 2 total grid steps whenever possible so a v7x megacore
    # ("parallel" axes) can shard work across both TensorCores.
    if lane_steps == 1 and B >= 2 and TB >= B:
        TB = max(1, B // 2)
    Bp = _round_up(B, TB)
    return TB, TL, GGp, Bp


def _make_yolo_kernel(stride, num_classes, anchors, grid_size):
    """Kernel body with stride / anchors / grid size baked in as Python scalars."""
    C = num_classes
    A = len(anchors)
    R = C + 5
    G = grid_size
    # bw = exp(w) * (a_w / stride) * stride — mirror the reference math exactly.
    wh_mult = [((aw / stride) * stride, (ah / stride) * stride) for aw, ah in anchors]

    def kernel(pred_ref, out_ref):
        TB, _, Rp, TL = pred_ref.shape

        # Grid x/y offsets generated in-kernel from a lane iota (shifted by the
        # lane-chunk start).  Float divide/floor is exact for these ranges
        # (col < 2^12, G <= 64) and avoids vector integer div/rem.
        col = (lax.broadcasted_iota(jnp.int32, (1, TL), 1)
               + pl.program_id(1) * TL).astype(jnp.float32)
        y_off = jnp.floor(col / float(G))
        x_off = col - y_off * float(G)
        off_xy = jnp.concatenate([x_off, y_off], axis=0)            # (2, TL)

        for t in range(TB):
            # ---- pass 1: streaming max / sum-of-exp over the ANCHOR axis
            # (torch softmax(..., dim=1)).  Only (C, TL) accumulators live.
            m = pred_ref[t, 0, 5:5 + C, :].astype(jnp.float32)
            for a in range(1, A):
                m = jnp.maximum(m, pred_ref[t, a, 5:5 + C, :].astype(jnp.float32))
            denom = jnp.exp(pred_ref[t, 0, 5:5 + C, :].astype(jnp.float32) - m)
            for a in range(1, A):
                denom = denom + jnp.exp(
                    pred_ref[t, a, 5:5 + C, :].astype(jnp.float32) - m)
            inv = pl.reciprocal(denom, approx=True)                 # EUP slot

            # ---- pass 2: decode each anchor, one aligned (Rp, TL) store each.
            for a in range(A):
                blk = pred_ref[t, a, :, :].astype(jnp.float32)      # (Rp, TL)
                xy = (_sigmoid(blk[0:2, :]) + off_xy) * stride      # (2, TL)
                w = jnp.exp(blk[2:3, :]) * wh_mult[a][0]            # (1, TL)
                h = jnp.exp(blk[3:4, :]) * wh_mult[a][1]            # (1, TL)
                conf = _sigmoid(blk[4:5, :])                        # (1, TL)
                cls = jnp.exp(blk[5:5 + C, :] - m) * inv            # (C, TL)
                pieces = [xy, w, h, conf, cls]
                if Rp > R:
                    # Pass the (zero) input pad rows through so the store is a
                    # full, sublane-aligned (Rp, TL) slab.
                    pieces.append(blk[R:Rp, :])
                rows = jnp.concatenate(pieces, axis=0)              # (Rp, TL)
                out_ref[t, a, :, :] = rows.astype(out_ref.dtype)

    return kernel


def yolo_layer_forward(prediction, anchors, num_classes, inp_dim):
    """JAX/Pallas equivalent of YOLOLayer.forward(prediction, targets=None)."""
    B, ch, G, G2 = prediction.shape
    A = len(anchors)
    C = num_classes
    R = C + 5
    assert G == G2 and ch == A * R and C >= 1
    GG = G * G
    Rp = _round_up(R, 8)
    stride = float(inp_dim) / float(G)

    TB, TL, GGp, Bp = _choose_tiles(B, A, Rp, GG, prediction.dtype.itemsize)

    # NCHW (B, A*R, G, G) -> (B, A, R, G*G) is a free contiguous reshape; one
    # pad op aligns anchor blocks to sublanes (R -> Rp), makes lanes dense
    # (GG -> GGp) and pads the batch to a multiple of the batch tile.
    pred = prediction.reshape(B, A, R, GG)
    if (Bp, Rp, GGp) != (B, R, GG):
        pred = jnp.pad(pred, ((0, Bp - B), (0, 0), (0, Rp - R), (0, GGp - GG)))

    kernel = _make_yolo_kernel(stride, C,
                               [tuple(map(float, a)) for a in anchors], G)
    out = pl.pallas_call(
        kernel,
        out_shape=jax.ShapeDtypeStruct((Bp, A, Rp, GGp), jnp.float32),
        grid_spec=pltpu.PrefetchScalarGridSpec(
            num_scalar_prefetch=0,
            grid=(Bp // TB, GGp // TL),
            in_specs=[pl.BlockSpec((TB, A, Rp, TL), lambda b, j: (b, 0, 0, j))],
            out_specs=pl.BlockSpec((TB, A, Rp, TL), lambda b, j: (b, 0, 0, j)),
        ),
        compiler_params=pltpu.CompilerParams(
            dimension_semantics=("parallel", "parallel"),
            vmem_limit_bytes=32 * 1024 * 1024,
        ),
    )(pred)

    # Torch-parity output layout (B, A*G*G, C+5).  This slice+transpose is a
    # separate XLA op that re-touches the whole output; skip it if downstream
    # code can consume the lane-dense (B, A, C+5, G*G) kernel layout directly
    # (or emit bf16 from the kernel if a lossy output is acceptable).
    out = out[:B, :, :R, :GG]
    output = jnp.transpose(out, (0, 1, 3, 2)).reshape(B, A * GG, R)
    # TODO(synk): training branch (build_targets + MSE/BCE losses + metrics)
    # not implemented — build_targets is undefined in the reference module.
    return output, 0


def yolo_layer_ref(prediction, anchors, num_classes, inp_dim):
    """Pure-JAX reference mirroring the PyTorch forward (targets=None)."""
    B, ch, G, _ = prediction.shape
    A = len(anchors)
    C = num_classes
    stride = float(inp_dim) / float(G)
    p = prediction.astype(jnp.float32).reshape(B, A, C + 5, G, G).transpose(0, 1, 3, 4, 2)
    x = jax.nn.sigmoid(p[..., 0])
    y = jax.nn.sigmoid(p[..., 1])
    w = p[..., 2]
    h = p[..., 3]
    conf = jax.nn.sigmoid(p[..., 4])
    cls = jax.nn.softmax(p[..., 5:], axis=1)     # dim=1 == anchor axis, as in torch
    jj = jnp.arange(G, dtype=jnp.float32)
    xoff = jnp.tile(jj, (G, 1)).reshape(1, 1, G, G)
    yoff = jnp.tile(jj, (G, 1)).T.reshape(1, 1, G, G)
    sa = jnp.asarray(anchors, jnp.float32) / stride
    aw = sa[:, 0].reshape(1, A, 1, 1)
    ah = sa[:, 1].reshape(1, A, 1, 1)
    boxes = jnp.stack([x + xoff, y + yoff, jnp.exp(w) * aw, jnp.exp(h) * ah], axis=-1)
    out = jnp.concatenate(
        [boxes.reshape(B, -1, 4) * stride,
         conf.reshape(B, -1, 1),
         cls.reshape(B, -1, C)], axis=-1)
    return out


if __name__ == "__main__":
    key = jax.random.PRNGKey(0)
    k1, k2 = jax.random.split(key)

    # Case 1: G=16 (GG already a multiple of 128), small C; grid=(2,1).
    anchors1 = [(10.0, 13.0), (16.0, 30.0), (33.0, 23.0)]
    C1, inp1, B1, G1 = 4, 64, 2, 16
    pred1 = jax.random.normal(k1, (B1, len(anchors1) * (C1 + 5), G1, G1),
                              dtype=jnp.float32)
    out1, loss1 = yolo_layer_forward(pred1, anchors1, C1, inp1)
    out1 = jax.block_until_ready(out1)
    ref1 = yolo_layer_ref(pred1, anchors1, C1, inp1)
    assert out1.shape == (B1, len(anchors1) * G1 * G1, C1 + 5), out1.shape
    # box coords / conf do not use the approx reciprocal -> tight tolerance
    assert jnp.allclose(out1[..., :5], ref1[..., :5], rtol=1e-4, atol=1e-4), \
        "case1: box/conf mismatch vs reference"
    # class probs use pl.reciprocal(approx=True) -> slightly looser tolerance
    assert jnp.allclose(out1, ref1, rtol=5e-3, atol=5e-3), "case1: mismatch vs reference"
    assert loss1 == 0

    # Case 2: real-style G=13 head — exercises GG->256 lane pad, R=11->16
    # sublane pad and batch padding to a multiple of the batch tile.
    anchors2 = [(30.0, 61.0), (62.0, 45.0), (59.0, 119.0)]
    C2, inp2, B2, G2 = 6, 416, 5, 13
    pred2 = jax.random.normal(k2, (B2, len(anchors2) * (C2 + 5), G2, G2),
                              dtype=jnp.float32)
    out2, loss2 = yolo_layer_forward(pred2, anchors2, C2, inp2)
    out2 = jax.block_until_ready(out2)
    ref2 = yolo_layer_ref(pred2, anchors2, C2, inp2)
    assert out2.shape == (B2, len(anchors2) * G2 * G2, C2 + 5), out2.shape
    assert jnp.allclose(out2[..., :5], ref2[..., :5], rtol=1e-4, atol=1e-4), \
        "case2: box/conf mismatch vs reference"
    assert jnp.allclose(out2, ref2, rtol=5e-3, atol=5e-3), "case2: mismatch vs reference"
    assert loss2 == 0

    print("KERNEL_OK")
</pallas_src>

<mosaic_0001>
module attributes {stable_mosaic.version = 11 : i64} {
  func.func @kernel(%arg0: i32, %arg1: i32, %arg2: memref<1x3x16x256xf32, #tpu.memory_space<vmem>>, %arg3: memref<1x3x16x256xf32, #tpu.memory_space<vmem>>) attributes {dimension_semantics = [#tpu.dimension_semantics<parallel>, #tpu.dimension_semantics<parallel>], iteration_bounds = array<i64: 2, 1>, scalar_prefetch = 0 : i64, scratch_operands = 0 : i64, tpu.core_type = #tpu.core_type<tc>, window_params = [{transform_indices = @transform_0, window_bounds = array<i64: 1, 3, 16, 256>}, {transform_indices = @transform_1, window_bounds = array<i64: 1, 3, 16, 256>}]} {
    %0 = tpu.iota {dimensions = array<i32: 1>} : vector<1x256xi32>
    %c256_i32 = arith.constant 256 : i32
    %1 = arith.muli %arg1, %c256_i32 : i32
    %2 = vector.broadcast %1 : i32 to vector<1x256xi32>
    %3 = arith.addi %0, %2 : vector<1x256xi32>
    %4 = arith.sitofp %3 : vector<1x256xi32> to vector<1x256xf32>
    %cst = arith.constant 1.600000e+01 : f32
    %5 = vector.broadcast %cst : f32 to vector<1x256xf32>
    %6 = arith.divf %4, %5 : vector<1x256xf32>
    %7 = math.floor %6 : vector<1x256xf32>
    %cst_0 = arith.constant 1.600000e+01 : f32
    %8 = vector.broadcast %cst_0 : f32 to vector<1x256xf32>
    %9 = arith.mulf %7, %8 : vector<1x256xf32>
    %10 = arith.subf %4, %9 : vector<1x256xf32>
    %11 = tpu.concatenate %10, %7 in 0 : vector<1x256xf32>, vector<1x256xf32> -> vector<2x256xf32>
    %c0 = arith.constant 0 : index
    %c0_1 = arith.constant 0 : index
    %c5 = arith.constant 5 : index
    %c0_2 = arith.constant 0 : index
    %12 = vector.load %arg2[%c0, %c0_1, %c5, %c0_2] : memref<1x3x16x256xf32, #tpu.memory_space<vmem>>, vector<1x1x4x256xf32>
    %13 = vector.shape_cast %12 : vector<1x1x4x256xf32> to vector<4x256xf32>
    %c0_3 = arith.constant 0 : index
    %c1 = arith.constant 1 : index
    %c5_4 = arith.constant 5 : index
    %c0_5 = arith.constant 0 : index
    %14 = vector.load %arg2[%c0_3, %c1, %c5_4, %c0_5] : memref<1x3x16x256xf32, #tpu.memory_space<vmem>>, vector<1x1x4x256xf32>
    %15 = vector.shape_cast %14 : vector<1x1x4x256xf32> to vector<4x256xf32>
    %16 = arith.maximumf %13, %15 : vector<4x256xf32>
    %c0_6 = arith.constant 0 : index
    %c2 = arith.constant 2 : index
    %c5_7 = arith.constant 5 : index
    %c0_8 = arith.constant 0 : index
    %17 = vector.load %arg2[%c0_6, %c2, %c5_7, %c0_8] : memref<1x3x16x256xf32, #tpu.memory_space<vmem>>, vector<1x1x4x256xf32>
    %18 = vector.shape_cast %17 : vector<1x1x4x256xf32> to vector<4x256xf32>
    %19 = arith.maximumf %16, %18 : vector<4x256xf32>
    %c0_9 = arith.constant 0 : index
    %c0_10 = arith.constant 0 : index
    %c5_11 = arith.constant 5 : index
    %c0_12 = arith.constant 0 : index
    %20 = vector.load %arg2[%c0_9, %c0_10, %c5_11, %c0_12] : memref<1x3x16x256xf32, #tpu.memory_space<vmem>>, vector<1x1x4x256xf32>
    %21 = vector.shape_cast %20 : vector<1x1x4x256xf32> to vector<4x256xf32>
    %22 = arith.subf %21, %19 : vector<4x256xf32>
    %23 = math.exp %22 : vector<4x256xf32>
    %c0_13 = arith.constant 0 : index
    %c1_14 = arith.constant 1 : index
    %c5_15 = arith.constant 5 : index
    %c0_16 = arith.constant 0 : index
    %24 = vector.load %arg2[%c0_13, %c1_14, %c5_15, %c0_16] : memref<1x3x16x256xf32, #tpu.memory_space<vmem>>, vector<1x1x4x256xf32>
    %25 = vector.shape_cast %24 : vector<1x1x4x256xf32> to vector<4x256xf32>
    %26 = arith.subf %25, %19 : vector<4x256xf32>
    %27 = math.exp %26 : vector<4x256xf32>
    %28 = arith.addf %23, %27 : vector<4x256xf32>
    %c0_17 = arith.constant 0 : index
    %c2_18 = arith.constant 2 : index
    %c5_19 = arith.constant 5 : index
    %c0_20 = arith.constant 0 : index
    %29 = vector.load %arg2[%c0_17, %c2_18, %c5_19, %c0_20] : memref<1x3x16x256xf32, #tpu.memory_space<vmem>>, vector<1x1x4x256xf32>
    %30 = vector.shape_cast %29 : vector<1x1x4x256xf32> to vector<4x256xf32>
    %31 = arith.subf %30, %19 : vector<4x256xf32>
    %32 = math.exp %31 : vector<4x256xf32>
    %33 = arith.addf %28, %32 : vector<4x256xf32>
    %34 = tpu.reciprocal %33 {approx = true} : vector<4x256xf32> -> vector<4x256xf32>
    %c0_21 = arith.constant 0 : index
    %c0_22 = arith.constant 0 : index
    %c0_23 = arith.constant 0 : index
    %c0_24 = arith.constant 0 : index
    %35 = vector.load %arg2[%c0_21, %c0_22, %c0_23, %c0_24] : memref<1x3x16x256xf32, #tpu.memory_space<vmem>>, vector<1x1x16x256xf32>
    %36 = vector.shape_cast %35 : vector<1x1x16x256xf32> to vector<16x256xf32>
    %37 = vector.extract_strided_slice %36 {offsets = [0, 0], sizes = [2, 256], strides = [1, 1]} : vector<16x256xf32> to vector<2x256xf32>
    %cst_25 = arith.constant 0.000000e+00 : f32
    %38 = vector.broadcast %cst_25 : f32 to vector<2x256xf32>
    %39 = arith.subf %38, %37 : vector<2x256xf32>
    %40 = math.exp %39 : vector<2x256xf32>
    %cst_26 = arith.constant 1.000000e+00 : f32
    %41 = vector.broadcast %cst_26 : f32 to vector<2x256xf32>
    %42 = arith.addf %41, %40 : vector<2x256xf32>
    %cst_27 = arith.constant 1.000000e+00 : f32
    %43 = vector.broadcast %cst_27 : f32 to vector<2x256xf32>
    %44 = arith.divf %43, %42 : vector<2x256xf32>
    %45 = arith.addf %44, %11 : vector<2x256xf32>
    %cst_28 = arith.constant 4.000000e+00 : f32
    %46 = vector.broadcast %cst_28 : f32 to vector<2x256xf32>
    %47 = arith.mulf %45, %46 : vector<2x256xf32>
    %48 = vector.extract_strided_slice %36 {offsets = [2, 0], sizes = [1, 256], strides = [1, 1]} : vector<16x256xf32> to vector<1x256xf32>
    %49 = math.exp %48 : vector<1x256xf32>
    %cst_29 = arith.constant 1.000000e+01 : f32
    %50 = vector.broadcast %cst_29 : f32 to vector<1x256xf32>
    %51 = arith.mulf %49, %50 : vector<1x256xf32>
    %52 = vector.extract_strided_slice %36 {offsets = [3, 0], sizes = [1, 256], strides = [1, 1]} : vector<16x256xf32> to vector<1x256xf32>
    %53 = math.exp %52 : vector<1x256xf32>
    %cst_30 = arith.constant 1.300000e+01 : f32
    %54 = vector.broadcast %cst_30 : f32 to vector<1x256xf32>
    %55 = arith.mulf %53, %54 : vector<1x256xf32>
    %56 = vector.extract_strided_slice %36 {offsets = [4, 0], sizes = [1, 256], strides = [1, 1]} : vector<16x256xf32> to vector<1x256xf32>
    %cst_31 = arith.constant 0.000000e+00 : f32
    %57 = vector.broadcast %cst_31 : f32 to vector<1x256xf32>
    %58 = arith.subf %57, %56 : vector<1x256xf32>
    %59 = math.exp %58 : vector<1x256xf32>
    %cst_32 = arith.constant 1.000000e+00 : f32
    %60 = vector.broadcast %cst_32 : f32 to vector<1x256xf32>
    %61 = arith.addf %60, %59 : vector<1x256xf32>
    %cst_33 = arith.constant 1.000000e+00 : f32
    %62 = vector.broadcast %cst_33 : f32 to vector<1x256xf32>
    %63 = arith.divf %62, %61 : vector<1x256xf32>
    %64 = vector.extract_strided_slice %36 {offsets = [5, 0], sizes = [4, 256], strides = [1, 1]} : vector<16x256xf32> to vector<4x256xf32>
    %65 = arith.subf %64, %19 : vector<4x256xf32>
    %66 = math.exp %65 : vector<4x256xf32>
    %67 = arith.mulf %66, %34 : vector<4x256xf32>
    %68 = vector.extract_strided_slice %36 {offsets = [9, 0], sizes = [7, 256], strides = [1, 1]} : vector<16x256xf32> to vector<7x256xf32>
    %69 = tpu.concatenate %47, %51, %55, %63, %67, %68 in 0 : vector<2x256xf32>, vector<1x256xf32>, vector<1x256xf32>, vector<1x256xf32>, vector<4x256xf32>, vector<7x256xf32> -> vector<16x256xf32>
    %c0_34 = arith.constant 0 : index
    %c0_35 = arith.constant 0 : index
    %c0_36 = arith.constant 0 : index
    %c0_37 = arith.constant 0 : index
    %70 = vector.load %arg3[%c0_34, %c0_35, %c0_36, %c0_37] : memref<1x3x16x256xf32, #tpu.memory_space<vmem>>, vector<1x1x16x256xf32>
    %71 = vector.shape_cast %70 : vector<1x1x16x256xf32> to vector<16x256xf32>
    %72 = vector.shape_cast %69 : vector<16x256xf32> to vector<1x1x16x256xf32>
    tpu.vector_store %arg3[%c0_34, %c0_35, %c0_36, %c0_37], %72 {strides = array<i32>} : memref<1x3x16x256xf32, #tpu.memory_space<vmem>>, vector<1x1x16x256xf32>,
    %c0_38 = arith.constant 0 : index
    %c1_39 = arith.constant 1 : index
    %c0_40 = arith.constant 0 : index
    %c0_41 = arith.constant 0 : index
    %73 = vector.load %arg2[%c0_38, %c1_39, %c0_40, %c0_41] : memref<1x3x16x256xf32, #tpu.memory_space<vmem>>, vector<1x1x16x256xf32>
    %74 = vector.shape_cast %73 : vector<1x1x16x256xf32> to vector<16x256xf32>
    %75 = vector.extract_strided_slice %74 {offsets = [0, 0], sizes = [2, 256], strides = [1, 1]} : vector<16x256xf32> to vector<2x256xf32>
    %cst_42 = arith.constant 0.000000e+00 : f32
    %76 = vector.broadcast %cst_42 : f32 to vector<2x256xf32>
    %77 = arith.subf %76, %75 : vector<2x256xf32>
    %78 = math.exp %77 : vector<2x256xf32>
    %cst_43 = arith.constant 1.000000e+00 : f32
    %79 = vector.broadcast %cst_43 : f32 to vector<2x256xf32>
    %80 = arith.addf %79, %78 : vector<2x256xf32>
    %cst_44 = arith.constant 1.000000e+00 : f32
    %81 = vector.broadcast %cst_44 : f32 to vector<2x256xf32>
    %82 = arith.divf %81, %80 : vector<2x256xf32>
    %83 = arith.addf %82, %11 : vector<2x256xf32>
    %cst_45 = arith.constant 4.000000e+00 : f32
    %84 = vector.broadcast %cst_45 : f32 to vector<2x256xf32>
    %85 = arith.mulf %83, %84 : vector<2x256xf32>
    %86 = vector.extract_strided_slice %74 {offsets = [2, 0], sizes = [1, 256], strides = [1, 1]} : vector<16x256xf32> to vector<1x256xf32>
    %87 = math.exp %86 : vector<1x256xf32>
    %cst_46 = arith.constant 1.600000e+01 : f32
    %88 = vector.broadcast %cst_46 : f32 to vector<1x256xf32>
    %89 = arith.mulf %87, %88 : vector<1x256xf32>
    %90 = vector.extract_strided_slice %74 {offsets = [3, 0], sizes = [1, 256], strides = [1, 1]} : vector<16x256xf32> to vector<1x256xf32>
    %91 = math.exp %90 : vector<1x256xf32>
    %cst_47 = arith.constant 3.000000e+01 : f32
    %92 = vector.broadcast %cst_47 : f32 to vector<1x256xf32>
    %93 = arith.mulf %91, %92 : vector<1x256xf32>
    %94 = vector.extract_strided_slice %74 {offsets = [4, 0], sizes = [1, 256], strides = [1, 1]} : vector<16x256xf32> to vector<1x256xf32>
    %cst_48 = arith.constant 0.000000e+00 : f32
    %95 = vector.broadcast %cst_48 : f32 to vector<1x256xf32>
    %96 = arith.subf %95, %94 : vector<1x256xf32>
    %97 = math.exp %96 : vector<1x256xf32>
    %cst_49 = arith.constant 1.000000e+00 : f32
    %98 = vector.broadcast %cst_49 : f32 to vector<1x256xf32>
    %99 = arith.addf %98, %97 : vector<1x256xf32>
    %cst_50 = arith.constant 1.000000e+00 : f32
    %100 = vector.broadcast %cst_50 : f32 to vector<1x256xf32>
    %101 = arith.divf %100, %99 : vector<1x256xf32>
    %102 = vector.extract_strided_slice %74 {offsets = [5, 0], sizes = [4, 256], strides = [1, 1]} : vector<16x256xf32> to vector<4x256xf32>
    %103 = arith.subf %102, %19 : vector<4x256xf32>
    %104 = math.exp %103 : vector<4x256xf32>
    %105 = arith.mulf %104, %34 : vector<4x256xf32>
    %106 = vector.extract_strided_slice %74 {offsets = [9, 0], sizes = [7, 256], strides = [1, 1]} : vector<16x256xf32> to vector<7x256xf32>
    %107 = tpu.concatenate %85, %89, %93, %101, %105, %106 in 0 : vector<2x256xf32>, vector<1x256xf32>, vector<1x256xf32>, vector<1x256xf32>, vector<4x256xf32>, vector<7x256xf32> -> vector<16x256xf32>
    %c0_51 = arith.constant 0 : index
    %c1_52 = arith.constant 1 : index
    %c0_53 = arith.constant 0 : index
    %c0_54 = arith.constant 0 : index
    %108 = vector.load %arg3[%c0_51, %c1_52, %c0_53, %c0_54] : memref<1x3x16x256xf32, #tpu.memory_space<vmem>>, vector<1x1x16x256xf32>
    %109 = vector.shape_cast %108 : vector<1x1x16x256xf32> to vector<16x256xf32>
    %110 = vector.shape_cast %107 : vector<16x256xf32> to vector<1x1x16x256xf32>
    tpu.vector_store %arg3[%c0_51, %c1_52, %c0_53, %c0_54], %110 {strides = array<i32>} : memref<1x3x16x256xf32, #tpu.memory_space<vmem>>, vector<1x1x16x256xf32>,
    %c0_55 = arith.constant 0 : index
    %c2_56 = arith.constant 2 : index
    %c0_57 = arith.constant 0 : index
    %c0_58 = arith.constant 0 : index
    %111 = vector.load %arg2[%c0_55, %c2_56, %c0_57, %c0_58] : memref<1x3x16x256xf32, #tpu.memory_space<vmem>>, vector<1x1x16x256xf32>
    %112 = vector.shape_cast %111 : vector<1x1x16x256xf32> to vector<16x256xf32>
    %113 = vector.extract_strided_slice %112 {offsets = [0, 0], sizes = [2, 256], strides = [1, 1]} : vector<16x256xf32> to vector<2x256xf32>
    %cst_59 = arith.constant 0.000000e+00 : f32
    %114 = vector.broadcast %cst_59 : f32 to vector<2x256xf32>
    %115 = arith.subf %114, %113 : vector<2x256xf32>
    %116 = math.exp %115 : vector<2x256xf32>
    %cst_60 = arith.constant 1.000000e+00 : f32
    %117 = vector.broadcast %cst_60 : f32 to vector<2x256xf32>
    %118 = arith.addf %117, %116 : vector<2x256xf32>
    %cst_61 = arith.constant 1.000000e+00 : f32
    %119 = vector.broadcast %cst_61 : f32 to vector<2x256xf32>
    %120 = arith.divf %119, %118 : vector<2x256xf32>
    %121 = arith.addf %120, %11 : vector<2x256xf32>
    %cst_62 = arith.constant 4.000000e+00 : f32
    %122 = vector.broadcast %cst_62 : f32 to vector<2x256xf32>
    %123 = arith.mulf %121, %122 : vector<2x256xf32>
    %124 = vector.extract_strided_slice %112 {offsets = [2, 0], sizes = [1, 256], strides = [1, 1]} : vector<16x256xf32> to vector<1x256xf32>
    %125 = math.exp %124 : vector<1x256xf32>
    %cst_63 = arith.constant 3.300000e+01 : f32
    %126 = vector.broadcast %cst_63 : f32 to vector<1x256xf32>
    %127 = arith.mulf %125, %126 : vector<1x256xf32>
    %128 = vector.extract_strided_slice %112 {offsets = [3, 0], sizes = [1, 256], strides = [1, 1]} : vector<16x256xf32> to vector<1x256xf32>
    %129 = math.exp %128 : vector<1x256xf32>
    %cst_64 = arith.constant 2.300000e+01 : f32
    %130 = vector.broadcast %cst_64 : f32 to vector<1x256xf32>
    %131 = arith.mulf %129, %130 : vector<1x256xf32>
    %132 = vector.extract_strided_slice %112 {offsets = [4, 0], sizes = [1, 256], strides = [1, 1]} : vector<16x256xf32> to vector<1x256xf32>
    %cst_65 = arith.constant 0.000000e+00 : f32
    %133 = vector.broadcast %cst_65 : f32 to vector<1x256xf32>
    %134 = arith.subf %133, %132 : vector<1x256xf32>
    %135 = math.exp %134 : vector<1x256xf32>
    %cst_66 = arith.constant 1.000000e+00 : f32
    %136 = vector.broadcast %cst_66 : f32 to vector<1x256xf32>
    %137 = arith.addf %136, %135 : vector<1x256xf32>
    %cst_67 = arith.constant 1.000000e+00 : f32
    %138 = vector.broadcast %cst_67 : f32 to vector<1x256xf32>
    %139 = arith.divf %138, %137 : vector<1x256xf32>
    %140 = vector.extract_strided_slice %112 {offsets = [5, 0], sizes = [4, 256], strides = [1, 1]} : vector<16x256xf32> to vector<4x256xf32>
    %141 = arith.subf %140, %19 : vector<4x256xf32>
    %142 = math.exp %141 : vector<4x256xf32>
    %143 = arith.mulf %142, %34 : vector<4x256xf32>
    %144 = vector.extract_strided_slice %112 {offsets = [9, 0], sizes = [7, 256], strides = [1, 1]} : vector<16x256xf32> to vector<7x256xf32>
    %145 = tpu.concatenate %123, %127, %131, %139, %143, %144 in 0 : vector<2x256xf32>, vector<1x256xf32>, vector<1x256xf32>, vector<1x256xf32>, vector<4x256xf32>, vector<7x256xf32> -> vector<16x256xf32>
    %c0_68 = arith.constant 0 : index
    %c2_69 = arith.constant 2 : index
    %c0_70 = arith.constant 0 : index
    %c0_71 = arith.constant 0 : index
    %146 = vector.load %arg3[%c0_68, %c2_69, %c0_70, %c0_71] : memref<1x3x16x256xf32, #tpu.memory_space<vmem>>, vector<1x1x16x256xf32>
    %147 = vector.shape_cast %146 : vector<1x1x16x256xf32> to vector<16x256xf32>
    %148 = vector.shape_cast %145 : vector<16x256xf32> to vector<1x1x16x256xf32>
    tpu.vector_store %arg3[%c0_68, %c2_69, %c0_70, %c0_71], %148 {strides = array<i32>} : memref<1x3x16x256xf32, #tpu.memory_space<vmem>>, vector<1x1x16x256xf32>,
    return
  }
  func.func @transform_0(%arg0: i32, %arg1: i32) -> (i32, i32, i32, i32) {
    %c0_i32 = arith.constant 0 : i32
    %c0_i32_0 = arith.constant 0 : i32
    %c0_i32_1 = arith.constant 0 : i32
    return %arg0, %c0_i32, %c0_i32_0, %arg1 : i32, i32, i32, i32
  }
  func.func @transform_1(%arg0: i32, %arg1: i32) -> (i32, i32, i32, i32) {
    %c0_i32 = arith.constant 0 : i32
    %c0_i32_0 = arith.constant 0 : i32
    %c0_i32_1 = arith.constant 0 : i32
    return %arg0, %c0_i32, %c0_i32_0, %arg1 : i32, i32, i32, i32
  }
}

</mosaic_0001>

<llo_original>
// kernel: tpu_custom_call.1
$region0: #{tpu_custom_call.1}
  #allocation0 [shape = 'u32[]', space=smem, size = 0x4, offset = 0x4, fixed_abs, tag = 'smem constant byte address 0x4 - core index']
  #allocation1 [shape = 'u32[144,128]{1,0:T(1,128)}', space=vmem, size = 0x12000, scoped, tag = 'internal scratch']
  %s0 = inlined_call_operand.hbm [shape: f32[2,3,16,256], index: 0, kind: input, shape index: {}]
  %s1 = inlined_call_operand.hbm [shape: f32[2,3,16,256], index: 1, kind: output, shape index: {}]
  %s2 = sld [smem:[#allocation0]]
  $region41: #{tpu_custom_call.1} parent=0
    _
  %s4 = ssub.s32 1, %s2
  %s5 = scalar_select 0, %s4, %s2
  $region1: #{tpu_custom_call.1} parent=0
    #allocation2 [shape = 'u8[98304]{0}', space=vmem, size = 0x18000, scoped, tag = 'input window, operand 0']
    #allocation3 [shape = 's32[2]{0}', space=sflag, size = 0x8, scoped, tag = 'scoped memory for tpu_custom_call.1']
    #allocation4 [shape = 's32[2]{0}', space=sflag, size = 0x8, scoped, tag = 'scoped memory for tpu_custom_call.1']
    #allocation5 [shape = 'u8[98304]{0}', space=vmem, size = 0x18000, scoped, tag = 'output window, operand 0']
    %6 = vsyncpa [#allocation3], 0
    %s7 = scalar_lea.sflag [#allocation3], 1
    %8 = vsyncpa %s7, 0
    %9 = vsyncpa [#allocation4], 0
    %s10 = scalar_lea.sflag [#allocation4], 1
    %11 = vsyncpa %s10, 0
    loop: start=0, step=1, limit=4
    $region2: #{tpu_custom_call.1} parent=1 // loop_pre_header
      _
    $region3: #{tpu_custom_call.1} parent=1 // loop_header
      %s13 = sphi 0, %s17
      %p14 = scmp.ge.s32.totalorder %s13, 4
      %s20 = sphi 0, %s32
      %s21 = sphi 0, %s28
      %s22 = sphi 0, %s20
      %s23 = sphi 0, %s21
      %s24 = sphi 0, %s22
      %s25 = sphi 0, %s23
      %s37 = sphi 0, %s39
      %s40 = sphi 0, %s37
      %s41 = sphi 0, %s40
      %s57 = sphi 0, %s41
      %s65 = sphi 0, %s67
      %s68 = sphi 0, %s65
      %s69 = sphi 0, %s68
      %s85 = sphi 0, %s69
    $region4: #{tpu_custom_call.1} parent=1 // loop_header_branch
      %16 = sbr.rel (%p14) target = $region8
    $region5: #{tpu_custom_call.1} parent=1 // loop_body
      %s18 = ssub.s32 %s13, 1
      %s19 = ssub.s32 %s13, 2
      %s26 = sadd.s32 1, %s21
      %p27 = scmp.ge.s32.totalorder %s26, 1
      %s28 = scalar_select %p27, 0, %s26
      %s29 = sadd.s32 1, %s20
      %s30 = scalar_select %p27, %s29, %s20
      %p31 = scmp.ge.s32.totalorder %s30, 2
      %s32 = scalar_select %p31, 0, %s30
      %s33 = ssub.s32 %s20, %s32
      %s34 = ssub.s32 %s21, %s28
      %s35 = sor.u32 %s33, %s34
      %p36 = scmp.eq.s32.totalorder %s35, 0
      %s38 = sadd.s32 %s37, 1
      %s39 = scalar_select %p36, %s37, %s38
      %p42 = pneg %p36
      %p43 = scmp.eq.s32.totalorder %s13, 1
      %p44 = por %p42, %p43
      %p45 = scmp.ne.s32.totalorder %s37, %s40
      %p46 = scmp.eq.s32.totalorder %s13, 0
      %p47 = por %p45, %p46
      %p48 = scmp.ne.s32.totalorder %s37, %s40
      %p49 = scmp.eq.s32.totalorder %s18, 1
      %p50 = por %p48, %p49
      %p51 = scmp.ne.s32.totalorder %s40, %s41
      %p52 = scmp.eq.s32.totalorder %s18, 0
      %p53 = por %p51, %p52
      %p54 = scmp.ne.s32.totalorder %s40, %s41
      %p55 = scmp.eq.s32.totalorder %s19, 1
      %p56 = por %p54, %p55
      %p58 = scmp.ne.s32.totalorder %s41, %s57
      %p59 = scmp.eq.s32.totalorder %s19, 0
      %p60 = por %p58, %p59
      %s61 = ssub.s32 %s20, %s32
      %s62 = ssub.s32 %s21, %s28
      %s63 = sor.u32 %s61, %s62
      %p64 = scmp.eq.s32.totalorder %s63, 0
      %s66 = sadd.s32 %s65, 1
      %s67 = scalar_select %p64, %s65, %s66
      %p70 = pneg %p64
      %p71 = scmp.eq.s32.totalorder %s13, 1
      %p72 = por %p70, %p71
      %p73 = scmp.ne.s32.totalorder %s65, %s68
      %p74 = scmp.eq.s32.totalorder %s13, 0
      %p75 = por %p73, %p74
      %p76 = scmp.ne.s32.totalorder %s65, %s68
      %p77 = scmp.eq.s32.totalorder %s18, 1
      %p78 = por %p76, %p77
      %p79 = scmp.ne.s32.totalorder %s68, %s69
      %p80 = scmp.eq.s32.totalorder %s18, 0
      %p81 = por %p79, %p80
      %p82 = scmp.ne.s32.totalorder %s68, %s69
      %p83 = scmp.eq.s32.totalorder %s19, 1
      %p84 = por %p82, %p83
      %p86 = scmp.ne.s32.totalorder %s69, %s85
      %p87 = scmp.eq.s32.totalorder %s19, 0
      %p88 = por %p86, %p87
      %p89 = scmp.le.s32.totalorder 1, %s13
      %p90 = scmp.lt.s32.totalorder %s13, 3
      %p91 = pnand %p89, %p90
      %p92 = pneg %p91
      // Predicated region
      $region9: #{tpu_custom_call.1} parent=5 // pred_check
        _
      $region10: #{tpu_custom_call.1} parent=5 // pred_check_branch
        %94 = sbr.rel (%p91) target = $region12
      $region11: #{tpu_custom_call.1} parent=5 // pred_region
        %s95 = ssub.s32 %s13, 1
      $region12: #{tpu_custom_call.1} parent=5 // pred_fallthru
        _
      %p96 = scmp.lt.s32.totalorder %s13, 2
      // Predicated region
      $region13: #{tpu_custom_call.1} parent=5 // pred_check
        %p97 = pneg %p96
      $region14: #{tpu_custom_call.1} parent=5 // pred_check_branch
        %99 = sbr.rel (%p97) target = $region16
      $region15: #{tpu_custom_call.1} parent=5 // pred_region
        // Predicated region
        $region17: #{tpu_custom_call.1} parent=15 // pred_check
          %p100 = pneg %p47
        $region18: #{tpu_custom_call.1} parent=15 // pred_check_branch
          %102 = sbr.rel (%p100) target = $region20
        $region19: #{tpu_custom_call.1} parent=15 // pred_region
          %s103 = sand.u32 %s37, 1
          %s104 = scalar_lea.sflag [#allocation3], %s103
          %s105 = sand.u32 %s37, 1
          %s106 = smul.addr %s105, 96
          %s107 = scalar_lea.vmem [#allocation2], %s106
          %s108 = smul.u32 2, %s21
          %s110 = ssub.s32 1536, 1536
          %111 = vsyncadd %s104, %s110
          %s112 = smul.addr %s20, 12
          %s113 = sadd.s32 %s108, %s112
          %s114 = smul.addr %s113, 128
          %s115 = scalar_lea.hbm %s0, %s114
          %s116 = sshll.u32 %s107, 4
          %s117 = int_to_ptr.vmem [resolvable:$true] %s116
          %122 = dma.hbm_to_vmem [thread:$0]  %s115, 1536, %s117, %s104, 256, 256, 16
        $region20: #{tpu_custom_call.1} parent=15 // pred_fallthru
          _
      $region16: #{tpu_custom_call.1} parent=5 // pred_fallthru
        _
      %p123 = scmp.le.s32.totalorder 1, %s13
      %p124 = scmp.lt.s32.totalorder %s13, 3
      %p125 = pnand %p123, %p124
      %p126 = pneg %p125
      // Predicated region
      $region21: #{tpu_custom_call.1} parent=5 // pred_check
        _
      $region22: #{tpu_custom_call.1} parent=5 // pred_check_branch
        %128 = sbr.rel (%p125) target = $region24
      $region23: #{tpu_custom_call.1} parent=5 // pred_region
        %s129 = ssub.s32 %s13, 1
        %s130 = sand.u32 %s40, 1
        %s131 = scalar_lea.sflag [#allocation3], %s130
        %s132 = sand.u32 %s40, 1
        %s133 = smul.addr %s132, 96
        %s134 = scalar_lea.vmem [#allocation2], %s133
        // Predicated region
        $region25: #{tpu_custom_call.1} parent=23 // pred_check
          %p135 = pneg %p53
        $region26: #{tpu_custom_call.1} parent=23 // pred_check_branch
          %137 = sbr.rel (%p135) target = $region28
        $region27: #{tpu_custom_call.1} parent=23 // pred_region
          %138 = dma.done %s131, 1536
        $region28: #{tpu_custom_call.1} parent=23 // pred_fallthru
          _
        %s139 = sand.u32 %s40, 1
        %s140 = scalar_lea.sflag [#allocation3], %s139
        %s141 = sand.u32 %s40, 1
        %s142 = smul.addr %s141, 96
        %s143 = scalar_lea.vmem [#allocation2], %s142
        %p144 = pneg %p53
        %p145 = pneg %p50
        %p146 = pneg %p81
        %p147 = pneg %p78
        %s148 = sand.u32 %s68, 1
        %s149 = scalar_lea.sflag [#allocation4], %s148
        %s150 = sand.u32 %s68, 1
        %s151 = smul.addr %s150, 96
        %s152 = scalar_lea.vmem [#allocation5], %s151
        %s153 = smul.u32 2, %s23
        %s154 = smul.u32 2, %s23
        %v155 = vlaneseq
        %v156 = vand.u32 %v155, 127
        %v157 = vadd.s32 %v156, 128
        %s158 = smul.u32 %s23, 256
        %v159 = vstv %s158
        %v160 = vadd.s32 %v156, %v159
        %v161 = vadd.s32 %v157, %v159
        %v162 = vcvt.s32.f32 %v160
        %v163 = vcvt.s32.f32 %v161
        %v164 = vrcp.pop 16.0
        %v165 = vmul.f32 %v162, %v164
        %v166 = vmul.f32 %v163, %v164
        %v167 = vfloor.f32 %v165
        %v168 = vfloor.f32 %v166
        %v169 = vmul.f32 %v167, 16.0
        %v170 = vmul.f32 %v168, 16.0
        %v171 = vsub.f32 %v162, %v169
        %v172 = vsub.f32 %v163, %v170
        %vm173 = vcmask 1040384
        %v174 = vsel %vm173, %v171, %v167
        %v175 = vsel %vm173, %v172, %v168
        %v176 = vld [vmem:[%s134] sm:$0xe0]
        %v177 = vld [vmem:[%s134 + $0x8] sm:$0xe0]
        %v178 = vld [vmem:[%s134 + $0x10] sm:$0x1]
        %v179 = vld [vmem:[%s134 + $0x18] sm:$0x1]
        %s180 = scalar_lea.vmem %s134, 32 [#allocation2]
        %v181 = vld [vmem:[%s180] sm:$0xe0]
        %v182 = vld [vmem:[%s180 + $0x8] sm:$0xe0]
        %v183 = vld [vmem:[%s180 + $0x10] sm:$0x1]
        %v184 = vld [vmem:[%s180 + $0x18] sm:$0x1]
        %v185 = vmax.f32 %v176, %v181
        %v186 = vmax.f32 %v177, %v182
        %v187 = vmax.f32 %v178, %v183
        %v188 = vmax.f32 %v179, %v184
        %s189 = scalar_lea.vmem %s134, 64 [#allocation2]
        %v190 = vld [vmem:[%s189] sm:$0xe0]
        %v191 = vld [vmem:[%s189 + $0x8] sm:$0xe0]
        %v192 = vld [vmem:[%s189 + $0x10] sm:$0x1]
        %v193 = vld [vmem:[%s189 + $0x18] sm:$0x1]
        %v194 = vmax.f32 %v185, %v190
        %v195 = vmax.f32 %v186, %v191
        %v196 = vmax.f32 %v187, %v192
        %v197 = vmax.f32 %v188, %v193
        %v198 = vsub.f32 %v176, %v194
        %v199 = vsub.f32 %v177, %v195
        %v200 = vsub.f32 %v178, %v196
        %v201 = vsub.f32 %v179, %v197
        %v202 = vmul.f32 %v198, 1.442695
        %v203 = vpow.pop %v202
        %v204 = vmul.f32 %v199, 1.442695
        %v205 = vpow.pop %v204
        %v206 = vmul.f32 %v200, 1.442695
        %v207 = vpow.pop %v206
        %v208 = vmul.f32 %v201, 1.442695
        %v209 = vpow.pop %v208
        %v210 = vsub.f32 %v181, %v194
        %v211 = vsub.f32 %v182, %v195
        %v212 = vsub.f32 %v183, %v196
        %v213 = vsub.f32 %v184, %v197
        %v214 = vmul.f32 %v210, 1.442695
        %v215 = vpow.pop %v214
        %v216 = vmul.f32 %v211, 1.442695
        %v217 = vpow.pop %v216
        %v218 = vmul.f32 %v212, 1.442695
        %v219 = vpow.pop %v218
        %v220 = vmul.f32 %v213, 1.442695
        %v221 = vpow.pop %v220
        %v222 = vadd.f32 %v203, %v215
        %v223 = vadd.f32 %v205, %v217
        %v224 = vadd.f32 %v207, %v219
        %v225 = vadd.f32 %v209, %v221
        %v226 = vsub.f32 %v190, %v194
        %v227 = vsub.f32 %v191, %v195
        %v228 = vsub.f32 %v192, %v196
        %v229 = vsub.f32 %v193, %v197
        %v230 = vmul.f32 %v226, 1.442695
        %v231 = vpow.pop %v230
        %v232 = vmul.f32 %v227, 1.442695
        %v233 = vpow.pop %v232
        %v234 = vmul.f32 %v228, 1.442695
        %v235 = vpow.pop %v234
        %v236 = vmul.f32 %v229, 1.442695
        %v237 = vpow.pop %v236
        %v238 = vadd.f32 %v222, %v231
        %v239 = vadd.f32 %v223, %v233
        %v240 = vadd.f32 %v224, %v235
        %v241 = vadd.f32 %v225, %v237
        %v242 = vrcp.pop %v238
        %v243 = vrcp.pop %v239
        %v244 = vrcp.pop %v240
        %v245 = vrcp.pop %v241
        %v246 = vld [vmem:[%s134] sm:$0xff]
        %v247 = vld [vmem:[%s134 + $0x8] sm:$0xff]
        %v248 = vld [vmem:[%s134 + $0x10] sm:$0xff]
        %v249 = vld [vmem:[%s134 + $0x18] sm:$0xff]
        %v250 = vsub.f32 0.0, %v246
        %v251 = vsub.f32 0.0, %v247
        %v252 = vmul.f32 %v250, 1.442695
        %v253 = vpow.pop %v252
        %v254 = vmul.f32 %v251, 1.442695
        %v255 = vpow.pop %v254
        %v256 = vadd.f32 %v253, 1.0
        %v257 = vadd.f32 %v255, 1.0
        %v258 = vrcp.pop %v256
        %v259 = vmul.f32 1.0, %v258
        %v260 = vrcp.pop %v257
        %v261 = vmul.f32 1.0, %v260
        %v262 = vadd.f32 %v259, %v174
        %v263 = vadd.f32 %v261, %v175
        %v264 = vmul.f32 %v262, 4.0
        %v265 = vmul.f32 %v263, 4.0
        %v266 = vmul.f32 %v246, 1.442695
        %v267 = vpow.pop %v266
        %v268 = vmul.f32 %v247, 1.442695
        %v269 = vpow.pop %v268
        %v270 = vmul.f32 %v267, 10.0
        %v271 = vmul.f32 %v269, 10.0
        %v272 = vmul.f32 %v267, 13.0
        %v273 = vmul.f32 %v269, 13.0
        %v274 = vsub.f32 %v246, %v194
        %v275 = vsub.f32 %v247, %v195
        %v276 = vsub.f32 %v248, %v196
        %v277 = vsub.f32 %v249, %v197
        %v278 = vmul.f32 %v274, 1.442695
        %v279 = vpow.pop %v278
        %v280 = vmul.f32 %v275, 1.442695
        %v281 = vpow.pop %v280
        %v282 = vmul.f32 %v276, 1.442695
        %v283 = vpow.pop %v282
        %v284 = vmul.f32 %v277, 1.442695
        %v285 = vpow.pop %v284
        %v286 = vmul.f32 %v279, %v242
        %v287 = vmul.f32 %v281, %v243
        %v288 = vmul.f32 %v283, %v244
        %v289 = vmul.f32 %v285, %v245
        %vm290 = vcmask 1041408
        %v291 = vsel %vm290, %v264, %v270
        %v292 = vsel %vm290, %v265, %v271
        %vm293 = vcmask 1042432
        %v294 = vsel %vm293, %v291, %v272
        %v295 = vsel %vm293, %v292, %v273
        %vm296 = vcmask 1043456
        %v297 = vsel %vm296, %v294, %v259
        %v298 = vsel %vm296, %v295, %v261
        %vm299 = vcmask 1044480
        %v300 = vsel %vm299, %v297, %v286
        %v301 = vsel %vm299, %v298, %v287
        %v302 = vsel %vm173, %v288, %v248
        %v303 = vsel %vm173, %v289, %v249
        %304 = vst [vmem:[%s152] sm:$0xff] %v300
        %305 = vst [vmem:[%s152 + $0x8] sm:$0xff] %v301
        %306 = vst [vmem:[%s152 + $0x10] sm:$0xff] %v302
        %307 = vst [vmem:[%s152 + $0x18] sm:$0xff] %v303
        %v308 = vld [vmem:[%s180] sm:$0xff]
        %v309 = vld [vmem:[%s180 + $0x8] sm:$0xff]
        %v310 = vld [vmem:[%s180 + $0x10] sm:$0xff]
        %v311 = vld [vmem:[%s180 + $0x18] sm:$0xff]
        %v312 = vsub.f32 0.0, %v308
        %v313 = vsub.f32 0.0, %v309
        %v314 = vmul.f32 %v312, 1.442695
        %v315 = vpow.pop %v314
        %v316 = vmul.f32 %v313, 1.442695
        %v317 = vpow.pop %v316
        %v318 = vadd.f32 %v315, 1.0
        %v319 = vadd.f32 %v317, 1.0
        %v320 = vrcp.pop %v318
        %v321 = vmul.f32 1.0, %v320
        %v322 = vrcp.pop %v319
        %v323 = vmul.f32 1.0, %v322
        %v324 = vadd.f32 %v321, %v174
        %v325 = vadd.f32 %v323, %v175
        %v326 = vmul.f32 %v324, 4.0
        %v327 = vmul.f32 %v325, 4.0
        %v328 = vmul.f32 %v308, 1.442695
        %v329 = vpow.pop %v328
        %v330 = vmul.f32 %v309, 1.442695
        %v331 = vpow.pop %v330
        %v332 = vmul.f32 %v329, 16.0
        %v333 = vmul.f32 %v331, 16.0
        %v334 = vmul.f32 %v329, 30.0
        %v335 = vmul.f32 %v331, 30.0
        %v336 = vsub.f32 %v308, %v194
        %v337 = vsub.f32 %v309, %v195
        %v338 = vsub.f32 %v310, %v196
        %v339 = vsub.f32 %v311, %v197
        %v340 = vmul.f32 %v336, 1.442695
        %v341 = vpow.pop %v340
        %v342 = vmul.f32 %v337, 1.442695
        %v343 = vpow.pop %v342
        %v344 = vmul.f32 %v338, 1.442695
        %v345 = vpow.pop %v344
        %v346 = vmul.f32 %v339, 1.442695
        %v347 = vpow.pop %v346
        %v348 = vmul.f32 %v341, %v242
        %v349 = vmul.f32 %v343, %v243
        %v350 = vmul.f32 %v345, %v244
        %v351 = vmul.f32 %v347, %v245
        %v352 = vsel %vm290, %v326, %v332
        %v353 = vsel %vm290, %v327, %v333
        %v354 = vsel %vm293, %v352, %v334
        %v355 = vsel %vm293, %v353, %v335
        %v356 = vsel %vm296, %v354, %v321
        %v357 = vsel %vm296, %v355, %v323
        %v358 = vsel %vm299, %v356, %v348
        %v359 = vsel %vm299, %v357, %v349
        %v360 = vsel %vm173, %v350, %v310
        %v361 = vsel %vm173, %v351, %v311
        %s362 = scalar_lea.vmem %s152, 32 [#allocation5]
        %363 = vst [vmem:[%s362] sm:$0xff] %v358
        %364 = vst [vmem:[%s362 + $0x8] sm:$0xff] %v359
        %365 = vst [vmem:[%s362 + $0x10] sm:$0xff] %v360
        %366 = vst [vmem:[%s362 + $0x18] sm:$0xff] %v361
        %v367 = vld [vmem:[%s189] sm:$0xff]
        %v368 = vld [vmem:[%s189 + $0x8] sm:$0xff]
        %v369 = vld [vmem:[%s189 + $0x10] sm:$0xff]
        %v370 = vld [vmem:[%s189 + $0x18] sm:$0xff]
        %v371 = vsub.f32 0.0, %v367
        %v372 = vsub.f32 0.0, %v368
        %v373 = vmul.f32 %v371, 1.442695
        %v374 = vpow.pop %v373
        %v375 = vmul.f32 %v372, 1.442695
        %v376 = vpow.pop %v375
        %v377 = vadd.f32 %v374, 1.0
        %v378 = vadd.f32 %v376, 1.0
        %v379 = vrcp.pop %v377
        %v380 = vmul.f32 1.0, %v379
        %v381 = vrcp.pop %v378
        %v382 = vmul.f32 1.0, %v381
        %v383 = vadd.f32 %v380, %v174
        %v384 = vadd.f32 %v382, %v175
        %v385 = vmul.f32 %v383, 4.0
        %v386 = vmul.f32 %v384, 4.0
        %v387 = vmul.f32 %v367, 1.442695
        %v388 = vpow.pop %v387
        %v389 = vmul.f32 %v368, 1.442695
        %v390 = vpow.pop %v389
        %v391 = vmul.f32 %v388, 33.0
        %v392 = vmul.f32 %v390, 33.0
        %v393 = vmul.f32 %v388, 23.0
        %v394 = vmul.f32 %v390, 23.0
        %v395 = vsub.f32 %v367, %v194
        %v396 = vsub.f32 %v368, %v195
        %v397 = vsub.f32 %v369, %v196
        %v398 = vsub.f32 %v370, %v197
        %v399 = vmul.f32 %v395, 1.442695
        %v400 = vpow.pop %v399
        %v401 = vmul.f32 %v396, 1.442695
        %v402 = vpow.pop %v401
        %v403 = vmul.f32 %v397, 1.442695
        %v404 = vpow.pop %v403
        %v405 = vmul.f32 %v398, 1.442695
        %v406 = vpow.pop %v405
        %v407 = vmul.f32 %v400, %v242
        %v408 = vmul.f32 %v402, %v243
        %v409 = vmul.f32 %v404, %v244
        %v410 = vmul.f32 %v406, %v245
        %v411 = vsel %vm290, %v385, %v391
        %v412 = vsel %vm290, %v386, %v392
        %v413 = vsel %vm293, %v411, %v393
        %v414 = vsel %vm293, %v412, %v394
        %v415 = vsel %vm296, %v413, %v380
        %v416 = vsel %vm296, %v414, %v382
        %v417 = vsel %vm299, %v415, %v407
        %v418 = vsel %vm299, %v416, %v408
        %v419 = vsel %vm173, %v409, %v369
        %v420 = vsel %vm173, %v410, %v370
        %s421 = scalar_lea.vmem %s152, 64 [#allocation5]
        %422 = vst [vmem:[%s421] sm:$0xff] %v417
        %423 = vst [vmem:[%s421 + $0x8] sm:$0xff] %v418
        %424 = vst [vmem:[%s421 + $0x10] sm:$0xff] %v419
        %425 = vst [vmem:[%s421 + $0x18] sm:$0xff] %v420
        %s426 = sand.u32 %s68, 1
        %s427 = scalar_lea.sflag [#allocation4], %s426
        %s428 = sand.u32 %s68, 1
        %s429 = smul.addr %s428, 96
        %s430 = scalar_lea.vmem [#allocation5], %s429
        // Predicated region
        $region29: #{tpu_custom_call.1} parent=23 // pred_check
          %p431 = pneg %p78
        $region30: #{tpu_custom_call.1} parent=23 // pred_check_branch
          %433 = sbr.rel (%p431) target = $region32
        $region31: #{tpu_custom_call.1} parent=23 // pred_region
          %s434 = smul.u32 2, %s23
          %s436 = ssub.s32 1536, 1536
          %437 = vsyncadd %s427, %s436
          %s438 = smul.addr %s22, 12
          %s439 = sadd.s32 %s434, %s438
          %s440 = smul.addr %s439, 128
          %s441 = scalar_lea.hbm %s1, %s440
          %s442 = sshll.u32 %s430, 4
          %s443 = int_to_ptr.vmem [resolvable:$true] %s442
          %448 = dma.vmem_to_hbm [thread:$0]  %s443, 1536, %s441, %s427, 256, 256, 16
        $region32: #{tpu_custom_call.1} parent=23 // pred_fallthru
          _
      $region24: #{tpu_custom_call.1} parent=5 // pred_fallthru
        _
      %p449 = scmp.le.s32.totalorder 2, %s13
      // Predicated region
      $region33: #{tpu_custom_call.1} parent=5 // pred_check
        %p450 = pneg %p449
      $region34: #{tpu_custom_call.1} parent=5 // pred_check_branch
        %452 = sbr.rel (%p450) target = $region36
      $region35: #{tpu_custom_call.1} parent=5 // pred_region
        %s453 = ssub.s32 %s13, 2
        // Predicated region
        $region37: #{tpu_custom_call.1} parent=35 // pred_check
          %p454 = pneg %p84
        $region38: #{tpu_custom_call.1} parent=35 // pred_check_branch
          %456 = sbr.rel (%p454) target = $region40
        $region39: #{tpu_custom_call.1} parent=35 // pred_region
          %s457 = sand.u32 %s69, 1
          %s458 = scalar_lea.sflag [#allocation4], %s457
          %s459 = sand.u32 %s69, 1
          %s460 = smul.addr %s459, 96
          %s461 = scalar_lea.vmem [#allocation5], %s460
          %462 = dma.done %s458, 1536
        $region40: #{tpu_custom_call.1} parent=35 // pred_fallthru
          _
      $region36: #{tpu_custom_call.1} parent=5 // pred_fallthru
        _
    $region6: #{tpu_custom_call.1} parent=1 // loop_footer
      %s17 = sadd.s32 1, %s13
    $region7: #{tpu_custom_call.1} parent=1 // loop_footer_branch
      %12 = sbr.rel target = $region3
    $region8: #{tpu_custom_call.1} parent=1 // loop_exit
      _
    %463 = vsyncpa [#allocation3], 1
    %s464 = scalar_lea.sflag [#allocation3], 1
    %465 = vsyncpa %s464, 1
    %466 = vsyncpa [#allocation4], 1
    %s467 = scalar_lea.sflag [#allocation4], 1
    %468 = vsyncpa %s467, 1

</llo_original>
